<compile_context>
chip_gen: v6e
topology: v6e:2x2x1
jax: 0.10.0
libtpu: 0.0.40
codegen_flags: <defaults>
</compile_context>

<pallas_src>
import functools
import math

import jax
import jax.numpy as jnp
from jax import lax
from jax.experimental import pallas as pl
from jax.experimental.pallas import tpu as pltpu


TARGET_BLOCK_BYTES = 8 << 20      # ~8 MiB of storage traffic per grid step
FIXED_VMEM_HEADROOM = 2 << 20     # Mosaic internal scratch / misc headroom
VMEM_CAP_FRACTION = 0.8           # never reserve more than ~80% of physical VMEM


def _vmem_capacity_bytes():
    """Physical VMEM per TensorCore; conservative (v7x) fallback if query fails."""
    try:
        info = pltpu.get_tpu_info()
        cap = getattr(info, "vmem_capacity_bytes", None)
        if cap:
            return int(cap)
    except Exception:
        pass
    return 64 << 20


def _sublane_align(itemsize):
    # Native second-minor tile: 8 for 4-byte, 16 for 2-byte, 32 for 1-byte dtypes.
    return 8 * max(1, 4 // int(itemsize))


def _choose_block_rows(M, row_bytes_storage, row_bytes_f32, vmem_cap, *, row_align):
    """Rows per block: ~TARGET_BLOCK_BYTES of HBM traffic, bounded by a VMEM budget."""
    target_rows = TARGET_BLOCK_BYTES // max(1, row_bytes_storage)
    # Per-row VMEM cost: double-buffered input + output blocks plus ~2 f32 temporaries.
    vmem_budget = int(VMEM_CAP_FRACTION * vmem_cap) - FIXED_VMEM_HEADROOM
    per_row_vmem = 4 * row_bytes_storage + 2 * row_bytes_f32
    budget_rows = max(row_align, vmem_budget // max(1, per_row_vmem))

    rows = max(row_align, min(target_rows, budget_rows))
    rows = max(row_align, (rows // row_align) * row_align)
    if rows < M:
        return rows
    # Whole problem fits in one block: still emit >=2 grid steps so both v7x
    # TensorCores get work under dimension_semantics=("parallel",).
    if M >= 2 * row_align:
        half = -(-M // 2)                       # cdiv(M, 2)
        half = -(-half // row_align) * row_align  # round up to alignment
        return min(half, M)
    # Tiny M: single block spanning the full (possibly unaligned) row extent.
    return M


def _vmem_limit(rows, row_bytes_storage, row_bytes_f32, vmem_cap):
    needed = rows * (4 * row_bytes_storage + 2 * row_bytes_f32) + FIXED_VMEM_HEADROOM
    cap = int(VMEM_CAP_FRACTION * vmem_cap)
    return int(min(cap, max(needed, 32 << 20)))


# ------------------------------- kernels ------------------------------------


def _l2norm_lastdim_kernel(x_ref, o_ref, *, eps):
    # x_ref / o_ref: [block_rows, D]; normalization axis D on lanes.
    xf = x_ref[...].astype(jnp.float32)
    sq = jnp.sum(xf * xf, axis=-1, keepdims=True)      # XLU lane reduce, [rows, 1]
    inv = lax.rsqrt(jnp.maximum(sq, eps * eps))         # EUP; == 1 / max(||x||, eps)
    o_ref[...] = (xf * inv).astype(o_ref.dtype)         # f32 multiply; VALU slack is free


def _l2norm_middim_kernel(x_ref, o_ref, *, eps):
    # x_ref / o_ref: [block_rows, K, T]; normalization axis K on sublanes, T on lanes.
    xf = x_ref[...].astype(jnp.float32)
    sq = jnp.sum(xf * xf, axis=1, keepdims=True)        # sublane reduce, [rows, 1, T]
    inv = lax.rsqrt(jnp.maximum(sq, eps * eps))
    o_ref[...] = (xf * inv).astype(o_ref.dtype)


# ------------------------------- drivers ------------------------------------


def _l2norm_lastdim(x2d, eps):
    M, D = x2d.shape
    itemsize = jnp.dtype(x2d.dtype).itemsize
    vmem_cap = _vmem_capacity_bytes()
    row_b = D * itemsize
    row_f32 = D * 4
    rows = _choose_block_rows(M, row_b, row_f32, vmem_cap,
                              row_align=_sublane_align(itemsize))
    grid = (pl.cdiv(M, rows),)
    return pl.pallas_call(
        functools.partial(_l2norm_lastdim_kernel, eps=float(eps)),
        out_shape=jax.ShapeDtypeStruct((M, D), x2d.dtype),
        grid_spec=pltpu.PrefetchScalarGridSpec(
            num_scalar_prefetch=0,
            grid=grid,
            in_specs=[pl.BlockSpec((rows, D), lambda i: (i, 0))],
            out_specs=pl.BlockSpec((rows, D), lambda i: (i, 0)),
        ),
        compiler_params=pltpu.CompilerParams(
            dimension_semantics=("parallel",),
            vmem_limit_bytes=_vmem_limit(rows, row_b, row_f32, vmem_cap),
        ),
    )(x2d)


def _l2norm_middim(x3d, eps):
    M, K, T = x3d.shape
    itemsize = jnp.dtype(x3d.dtype).itemsize
    vmem_cap = _vmem_capacity_bytes()
    row_b = K * T * itemsize
    row_f32 = K * T * 4
    # Leading block dim has no (8,128) constraint; last two dims are full extents.
    rows = _choose_block_rows(M, row_b, row_f32, vmem_cap, row_align=1)
    grid = (pl.cdiv(M, rows),)
    return pl.pallas_call(
        functools.partial(_l2norm_middim_kernel, eps=float(eps)),
        out_shape=jax.ShapeDtypeStruct((M, K, T), x3d.dtype),
        grid_spec=pltpu.PrefetchScalarGridSpec(
            num_scalar_prefetch=0,
            grid=grid,
            in_specs=[pl.BlockSpec((rows, K, T), lambda i: (i, 0, 0))],
            out_specs=pl.BlockSpec((rows, K, T), lambda i: (i, 0, 0)),
        ),
        compiler_params=pltpu.CompilerParams(
            dimension_semantics=("parallel",),
            vmem_limit_bytes=_vmem_limit(rows, row_b, row_f32, vmem_cap),
        ),
    )(x3d)


def l2_normalization(x, dim=2, eps=1e-12):
    """JAX/Pallas equivalent of torch.nn.functional.normalize(x, p=2, dim=dim, eps=eps)."""
    ndim = x.ndim
    dim = dim % ndim
    shape = x.shape
    if dim == ndim - 1:
        # Normalization axis already last: flatten leading dims (pure reshape).
        out2d = _l2norm_lastdim(x.reshape(-1, shape[-1]), eps)
        return out2d.reshape(shape)
    # Non-last axis: pure reshape to [M, K, T] (no HBM transpose) and reduce over
    # the sublane axis K inside the kernel.
    M = math.prod(shape[:dim])
    K = shape[dim]
    T = math.prod(shape[dim + 1:])
    out3d = _l2norm_middim(x.reshape(M, K, T), eps)
    return out3d.reshape(shape)


# ------------------------------- reference & test ---------------------------


def _reference(x, dim=2, eps=1e-12):
    xf = x.astype(jnp.float32)
    norm = jnp.sqrt(jnp.sum(xf * xf, axis=dim, keepdims=True))
    return xf / jnp.maximum(norm, eps)


if __name__ == "__main__":
    key = jax.random.PRNGKey(0)
    k1, k2, k3, k4 = jax.random.split(key, 4)

    # Module default dim=2 on a 3-D [batch=2, seq=8, hidden=32] input (last-dim path).
    x1 = jax.random.normal(k1, (2, 8, 32), dtype=jnp.float32)
    out1 = jax.block_until_ready(l2_normalization(x1, dim=2, eps=1e-12))
    assert out1.shape == x1.shape and out1.dtype == x1.dtype
    assert jnp.allclose(out1, _reference(x1, dim=2), atol=1e-6, rtol=1e-6), "mismatch (3-D, dim=2)"

    # Module default dim=2 on a 4-D [batch=2, channels=4, 16, 16] input:
    # non-last dim handled by reshape + in-kernel sublane reduce (no HBM transpose).
    x2 = jax.random.normal(k2, (2, 4, 16, 16), dtype=jnp.float32)
    out2 = jax.block_until_ready(l2_normalization(x2, dim=2, eps=1e-12))
    assert out2.shape == x2.shape and out2.dtype == x2.dtype
    assert jnp.allclose(out2, _reference(x2, dim=2), atol=1e-6, rtol=1e-6), "mismatch (4-D, dim=2)"

    # Ragged row count (M = 15, not a multiple of 8) on the last-dim path.
    x3 = jax.random.normal(k3, (3, 5, 32), dtype=jnp.float32)
    out3 = jax.block_until_ready(l2_normalization(x3, dim=2, eps=1e-12))
    assert jnp.allclose(out3, _reference(x3, dim=2), atol=1e-6, rtol=1e-6), "mismatch (ragged M)"

    # Normalize over a middle axis of a 3-D input.
    x4 = jax.random.normal(k4, (2, 16, 8), dtype=jnp.float32)
    out4 = jax.block_until_ready(l2_normalization(x4, dim=1, eps=1e-12))
    assert jnp.allclose(out4, _reference(x4, dim=1), atol=1e-6, rtol=1e-6), "mismatch (dim=1)"

    # bf16 storage dtype: compute stays in f32, only the final store rounds to bf16.
    x5 = x1.astype(jnp.bfloat16)
    out5 = jax.block_until_ready(l2_normalization(x5, dim=2, eps=1e-12))
    assert out5.dtype == jnp.bfloat16
    ref5 = _reference(x5.astype(jnp.float32), dim=2)
    assert jnp.allclose(out5.astype(jnp.float32), ref5, atol=1e-2, rtol=1e-2), "mismatch (bf16)"

    print("KERNEL_OK")
</pallas_src>

<mosaic_0001>
module attributes {stable_mosaic.version = 11 : i64} {
  func.func @_l2norm_lastdim_kernel(%arg0: i32, %arg1: memref<8x32xf32, #tpu.memory_space<vmem>>, %arg2: memref<8x32xf32, #tpu.memory_space<vmem>>) attributes {dimension_semantics = [#tpu.dimension_semantics<parallel>], iteration_bounds = array<i64: 2>, scalar_prefetch = 0 : i64, scratch_operands = 0 : i64, tpu.core_type = #tpu.core_type<tc>, window_params = [{transform_indices = @transform_0, window_bounds = array<i64: 8, 32>}, {transform_indices = @transform_1, window_bounds = array<i64: 8, 32>}]} {
    %c0 = arith.constant 0 : index
    %c0_0 = arith.constant 0 : index
    %0 = vector.load %arg1[%c0, %c0_0] : memref<8x32xf32, #tpu.memory_space<vmem>>, vector<8x32xf32>
    %1 = arith.mulf %0, %0 : vector<8x32xf32>
    %cst = arith.constant dense<0.000000e+00> : vector<8xf32>
    %2 = vector.multi_reduction <add>, %1, %cst [1] : vector<8x32xf32> to vector<8xf32>
    %3 = vector.shape_cast %2 : vector<8xf32> to vector<8x1xf32>
    %cst_1 = arith.constant 1.000000e-24 : f32
    %4 = vector.broadcast %cst_1 : f32 to vector<8x1xf32>
    %5 = arith.maximumf %3, %4 : vector<8x1xf32>
    %6 = math.rsqrt %5 : vector<8x1xf32>
    %7 = vector.broadcast %6 : vector<8x1xf32> to vector<8x32xf32>
    %8 = arith.mulf %0, %7 : vector<8x32xf32>
    %c0_2 = arith.constant 0 : index
    %c0_3 = arith.constant 0 : index
    %9 = vector.load %arg2[%c0_2, %c0_3] : memref<8x32xf32, #tpu.memory_space<vmem>>, vector<8x32xf32>
    tpu.vector_store %arg2[%c0_2, %c0_3], %8 {strides = array<i32>} : memref<8x32xf32, #tpu.memory_space<vmem>>, vector<8x32xf32>,
    return
  }
  func.func @transform_0(%arg0: i32) -> (i32, i32) {
    %c0_i32 = arith.constant 0 : i32
    %c0_i32_0 = arith.constant 0 : i32
    return %arg0, %c0_i32 : i32, i32
  }
  func.func @transform_1(%arg0: i32) -> (i32, i32) {
    %c0_i32 = arith.constant 0 : i32
    %c0_i32_0 = arith.constant 0 : i32
    return %arg0, %c0_i32 : i32, i32
  }
}

</mosaic_0001>

<llo_original>
// kernel: tpu_custom_call.1
$region0: #{tpu_custom_call.1}
  #allocation0 [shape = 'u32[]', space=smem, size = 0x4, offset = 0x4, fixed_abs, tag = 'smem constant byte address 0x4 - core index']
  #allocation1 [shape = 'u32[144,128]{1,0:T(1,128)}', space=vmem, size = 0x12000, scoped, tag = 'internal scratch']
  %s0 = inlined_call_operand.hbm [shape: f32[16,32], index: 0, kind: input, shape index: {}]
  %s1 = inlined_call_operand.hbm [shape: f32[16,32], index: 1, kind: output, shape index: {}]
  %s2 = sld [smem:[#allocation0]]
  $region41: #{tpu_custom_call.1} parent=0
    _
  %s4 = ssub.s32 1, %s2
  %s5 = scalar_select 0, %s4, %s2
  $region1: #{tpu_custom_call.1} parent=0
    #allocation2 [shape = 'u8[8192]{0}', space=vmem, size = 0x2000, scoped, tag = 'input window, operand 0']
    #allocation3 [shape = 's32[2]{0}', space=sflag, size = 0x8, scoped, tag = 'scoped memory for tpu_custom_call.1']
    #allocation4 [shape = 's32[2]{0}', space=sflag, size = 0x8, scoped, tag = 'scoped memory for tpu_custom_call.1']
    #allocation5 [shape = 'u8[8192]{0}', space=vmem, size = 0x2000, scoped, tag = 'output window, operand 0']
    %6 = vsyncpa [#allocation3], 0
    %s7 = scalar_lea.sflag [#allocation3], 1
    %8 = vsyncpa %s7, 0
    %9 = vsyncpa [#allocation4], 0
    %s10 = scalar_lea.sflag [#allocation4], 1
    %11 = vsyncpa %s10, 0
    loop: start=0, step=1, limit=4
    $region2: #{tpu_custom_call.1} parent=1 // loop_pre_header
      _
    $region3: #{tpu_custom_call.1} parent=1 // loop_header
      %s13 = sphi 0, %s17
      %p14 = scmp.ge.s32.totalorder %s13, 4
      %s23 = sphi 0, %s25
      %s26 = sphi 0, %s23
      %s27 = sphi 0, %s26
      %s43 = sphi 0, %s27
      %s49 = sphi 0, %s51
      %s52 = sphi 0, %s49
      %s53 = sphi 0, %s52
      %s69 = sphi 0, %s53
    $region4: #{tpu_custom_call.1} parent=1 // loop_header_branch
      %16 = sbr.rel (%p14) target = $region8
    $region5: #{tpu_custom_call.1} parent=1 // loop_body
      %s18 = ssub.s32 %s13, 1
      %s19 = ssub.s32 %s13, 2
      %s20 = sadd.s32 %s13, 1
      %s21 = ssub.s32 %s13, %s20
      %p22 = scmp.eq.s32.totalorder %s21, 0
      %s24 = sadd.s32 %s23, 1
      %s25 = scalar_select %p22, %s23, %s24
      %p28 = pneg %p22
      %p29 = scmp.eq.s32.totalorder %s13, 1
      %p30 = por %p28, %p29
      %p31 = scmp.ne.s32.totalorder %s23, %s26
      %p32 = scmp.eq.s32.totalorder %s13, 0
      %p33 = por %p31, %p32
      %p34 = scmp.ne.s32.totalorder %s23, %s26
      %p35 = scmp.eq.s32.totalorder %s18, 1
      %p36 = por %p34, %p35
      %p37 = scmp.ne.s32.totalorder %s26, %s27
      %p38 = scmp.eq.s32.totalorder %s18, 0
      %p39 = por %p37, %p38
      %p40 = scmp.ne.s32.totalorder %s26, %s27
      %p41 = scmp.eq.s32.totalorder %s19, 1
      %p42 = por %p40, %p41
      %p44 = scmp.ne.s32.totalorder %s27, %s43
      %p45 = scmp.eq.s32.totalorder %s19, 0
      %p46 = por %p44, %p45
      %s47 = ssub.s32 %s13, %s20
      %p48 = scmp.eq.s32.totalorder %s47, 0
      %s50 = sadd.s32 %s49, 1
      %s51 = scalar_select %p48, %s49, %s50
      %p54 = pneg %p48
      %p55 = scmp.eq.s32.totalorder %s13, 1
      %p56 = por %p54, %p55
      %p57 = scmp.ne.s32.totalorder %s49, %s52
      %p58 = scmp.eq.s32.totalorder %s13, 0
      %p59 = por %p57, %p58
      %p60 = scmp.ne.s32.totalorder %s49, %s52
      %p61 = scmp.eq.s32.totalorder %s18, 1
      %p62 = por %p60, %p61
      %p63 = scmp.ne.s32.totalorder %s52, %s53
      %p64 = scmp.eq.s32.totalorder %s18, 0
      %p65 = por %p63, %p64
      %p66 = scmp.ne.s32.totalorder %s52, %s53
      %p67 = scmp.eq.s32.totalorder %s19, 1
      %p68 = por %p66, %p67
      %p70 = scmp.ne.s32.totalorder %s53, %s69
      %p71 = scmp.eq.s32.totalorder %s19, 0
      %p72 = por %p70, %p71
      %p73 = scmp.le.s32.totalorder 1, %s13
      %p74 = scmp.lt.s32.totalorder %s13, 3
      %p75 = pnand %p73, %p74
      %p76 = pneg %p75
      // Predicated region
      $region9: #{tpu_custom_call.1} parent=5 // pred_check
        _
      $region10: #{tpu_custom_call.1} parent=5 // pred_check_branch
        %78 = sbr.rel (%p75) target = $region12
      $region11: #{tpu_custom_call.1} parent=5 // pred_region
        %s79 = ssub.s32 %s13, 1
      $region12: #{tpu_custom_call.1} parent=5 // pred_fallthru
        _
      %p80 = scmp.lt.s32.totalorder %s13, 2
      // Predicated region
      $region13: #{tpu_custom_call.1} parent=5 // pred_check
        %p81 = pneg %p80
      $region14: #{tpu_custom_call.1} parent=5 // pred_check_branch
        %83 = sbr.rel (%p81) target = $region16
      $region15: #{tpu_custom_call.1} parent=5 // pred_region
        // Predicated region
        $region17: #{tpu_custom_call.1} parent=15 // pred_check
          %p84 = pneg %p33
        $region18: #{tpu_custom_call.1} parent=15 // pred_check_branch
          %86 = sbr.rel (%p84) target = $region20
        $region19: #{tpu_custom_call.1} parent=15 // pred_region
          %s87 = sand.u32 %s23, 1
          %s88 = scalar_lea.sflag [#allocation3], %s87
          %s89 = sand.u32 %s23, 1
          %s90 = smul.addr %s89, 8
          %s91 = scalar_lea.vmem [#allocation2], %s90
          %s93 = ssub.s32 128, 128
          %94 = vsyncadd %s88, %s93
          %s95 = smul.addr %s13, 128
          %s96 = scalar_lea.hbm %s0, %s95
          %s98 = sshll.u32 %s91, 4
          %s99 = int_to_ptr.vmem [resolvable:$true] %s98
          %101 = dma.hbm_to_vmem [thread:$0]  %s96, 128, %s99, %s88
        $region20: #{tpu_custom_call.1} parent=15 // pred_fallthru
          _
      $region16: #{tpu_custom_call.1} parent=5 // pred_fallthru
        _
      %p102 = scmp.le.s32.totalorder 1, %s13
      %p103 = scmp.lt.s32.totalorder %s13, 3
      %p104 = pnand %p102, %p103
      %p105 = pneg %p104
      // Predicated region
      $region21: #{tpu_custom_call.1} parent=5 // pred_check
        _
      $region22: #{tpu_custom_call.1} parent=5 // pred_check_branch
        %107 = sbr.rel (%p104) target = $region24
      $region23: #{tpu_custom_call.1} parent=5 // pred_region
        %s108 = ssub.s32 %s13, 1
        %s109 = sand.u32 %s26, 1
        %s110 = scalar_lea.sflag [#allocation3], %s109
        %s111 = sand.u32 %s26, 1
        %s112 = smul.addr %s111, 8
        %s113 = scalar_lea.vmem [#allocation2], %s112
        // Predicated region
        $region25: #{tpu_custom_call.1} parent=23 // pred_check
          %p114 = pneg %p39
        $region26: #{tpu_custom_call.1} parent=23 // pred_check_branch
          %116 = sbr.rel (%p114) target = $region28
        $region27: #{tpu_custom_call.1} parent=23 // pred_region
          %117 = dma.done %s110, 128
        $region28: #{tpu_custom_call.1} parent=23 // pred_fallthru
          _
        %s118 = sand.u32 %s26, 1
        %s119 = scalar_lea.sflag [#allocation3], %s118
        %s120 = sand.u32 %s26, 1
        %s121 = smul.addr %s120, 8
        %s122 = scalar_lea.vmem [#allocation2], %s121
        %p123 = pneg %p39
        %p124 = pneg %p36
        %p125 = pneg %p65
        %p126 = pneg %p62
        %s127 = sand.u32 %s52, 1
        %s128 = scalar_lea.sflag [#allocation4], %s127
        %s129 = sand.u32 %s52, 1
        %s130 = smul.addr %s129, 8
        %s131 = scalar_lea.vmem [#allocation5], %s130
        %v132 = vld [vmem:[%s113] sm:$0xff]
        %v133 = vmul.f32 %v132, %v132
        %vm134 = vcmask 261120
        %v135 = vsel %vm134, %v133, 0.0
        %136 = vadd.xlane.f32.xlu0 %v135
        %v137 = vpop.xlane.xlu0 %136
        %v138 = vmax.f32 %v137, 1e-24
        %v139 = vrsqrt.pop %v138
        %v140 = vmul.f32 %v132, %v139
        %141 = vst.msk [vmem:[%s131] sm:$0xff] %vm134, %v140
        %s142 = sand.u32 %s52, 1
        %s143 = scalar_lea.sflag [#allocation4], %s142
        %s144 = sand.u32 %s52, 1
        %s145 = smul.addr %s144, 8
        %s146 = scalar_lea.vmem [#allocation5], %s145
        // Predicated region
        $region29: #{tpu_custom_call.1} parent=23 // pred_check
          %p147 = pneg %p62
        $region30: #{tpu_custom_call.1} parent=23 // pred_check_branch
          %149 = sbr.rel (%p147) target = $region32
        $region31: #{tpu_custom_call.1} parent=23 // pred_region
          %s151 = ssub.s32 128, 128
          %152 = vsyncadd %s143, %s151
          %s153 = smul.addr %s18, 128
          %s154 = scalar_lea.hbm %s1, %s153
          %s156 = sshll.u32 %s146, 4
          %s157 = int_to_ptr.vmem [resolvable:$true] %s156
          %159 = dma.vmem_to_hbm [thread:$0]  %s157, 128, %s154, %s143
        $region32: #{tpu_custom_call.1} parent=23 // pred_fallthru
          _
      $region24: #{tpu_custom_call.1} parent=5 // pred_fallthru
        _
      %p160 = scmp.le.s32.totalorder 2, %s13
      // Predicated region
      $region33: #{tpu_custom_call.1} parent=5 // pred_check
        %p161 = pneg %p160
      $region34: #{tpu_custom_call.1} parent=5 // pred_check_branch
        %163 = sbr.rel (%p161) target = $region36
      $region35: #{tpu_custom_call.1} parent=5 // pred_region
        %s164 = ssub.s32 %s13, 2
        // Predicated region
        $region37: #{tpu_custom_call.1} parent=35 // pred_check
          %p165 = pneg %p68
        $region38: #{tpu_custom_call.1} parent=35 // pred_check_branch
          %167 = sbr.rel (%p165) target = $region40
        $region39: #{tpu_custom_call.1} parent=35 // pred_region
          %s168 = sand.u32 %s53, 1
          %s169 = scalar_lea.sflag [#allocation4], %s168
          %s170 = sand.u32 %s53, 1
          %s171 = smul.addr %s170, 8
          %s172 = scalar_lea.vmem [#allocation5], %s171
          %173 = dma.done %s169, 128
        $region40: #{tpu_custom_call.1} parent=35 // pred_fallthru
          _
      $region36: #{tpu_custom_call.1} parent=5 // pred_fallthru
        _
    $region6: #{tpu_custom_call.1} parent=1 // loop_footer
      %s17 = sadd.s32 1, %s13
    $region7: #{tpu_custom_call.1} parent=1 // loop_footer_branch
      %12 = sbr.rel target = $region3
    $region8: #{tpu_custom_call.1} parent=1 // loop_exit
      _
    %174 = vsyncpa [#allocation3], 1
    %s175 = scalar_lea.sflag [#allocation3], 1
    %176 = vsyncpa %s175, 1
    %177 = vsyncpa [#allocation4], 1
    %s178 = scalar_lea.sflag [#allocation4], 1
    %179 = vsyncpa %s178, 1

</llo_original>
